<compile_context>
chip_gen: v5e
topology: v5e:2x2
jax: 0.10.0
libtpu: 0.0.40
codegen_flags: <defaults>
</compile_context>

<pallas_src>
import functools

import jax
import jax.numpy as jnp
from jax.experimental import pallas as pl
from jax.experimental.pallas import tpu as pltpu

LEAKY_SLOPE = 0.2
BN_EPS = 1e-5
# 512-row tiles: ~85% of HBM roofline (measured Pallas data) and small enough
# to leave headroom inside v7x's 64 MiB VMEM even at ndf=64 production widths.
TILE_M = 512
VMEM_LIMIT = 48 * 1024 * 1024


def _round_up(x, m):
    return (x + m - 1) // m * m


# ----------------------- Pallas kernels -----------------------

def _gemm_act_kernel(a_ref, b_ref, o_ref, *, act):
    y = jnp.dot(a_ref[...], b_ref[...], preferred_element_type=jnp.float32)
    if act == "leaky":
        y = jnp.where(y > 0, y, LEAKY_SLOPE * y)
    elif act == "sigmoid":
        # exp + approx reciprocal both ride the EUP slot (free under the MXU).
        y = pl.reciprocal(1.0 + jnp.exp(-y), approx=True)
    o_ref[...] = y


def _gemm_stats_kernel(a_ref, b_ref, o_ref, stats_ref, acc_ref, *,
                       m_real, tile_m):
    """GEMM with fused per-channel (sum, sum^2) accumulation in the epilogue."""
    i = pl.program_id(0)
    y = jnp.dot(a_ref[...], b_ref[...], preferred_element_type=jnp.float32)
    o_ref[...] = y

    @pl.when(i == 0)
    def _init():
        acc_ref[...] = jnp.zeros_like(acc_ref)

    # Zero-padded rows must not bias the BatchNorm statistics.
    rows = jax.lax.broadcasted_iota(jnp.int32, (tile_m, 1), 0) + i * tile_m
    ym = jnp.where(rows < m_real, y, 0.0)
    s = jnp.sum(ym, axis=0, keepdims=True)
    ss = jnp.sum(ym * ym, axis=0, keepdims=True)
    acc_ref[...] += jnp.concatenate([s, ss], axis=0)

    @pl.when(i == pl.num_programs(0) - 1)
    def _finalize():
        stats_ref[...] = acc_ref[...]


def _affine_leaky_kernel(x_ref, sc_ref, sh_ref, o_ref):
    y = x_ref[...] * sc_ref[...] + sh_ref[...]
    o_ref[...] = jnp.where(y > 0, y, LEAKY_SLOPE * y)


# ----------------------- kernel wrappers -----------------------

def conv_gemm(patches, w_mat, act="none", with_stats=False):
    """(M,K)@(K,N) in bf16 (f32 accumulation), tiled & pipelined over M.

    with_stats=True additionally returns per-channel (sum, sum^2) of the f32
    result, accumulated inside the kernel (no second HBM pass over y).
    """
    M, K = patches.shape
    _, N = w_mat.shape
    tm = min(TILE_M, _round_up(M, 8))
    Mp = _round_up(M, tm)

    a = patches.astype(jnp.bfloat16)
    if Mp != M:
        a = jnp.pad(a, ((0, Mp - M), (0, 0)))
    b = w_mat.astype(jnp.bfloat16)

    grid = (Mp // tm,)
    a_spec = pl.BlockSpec((tm, K), lambda i: (i, 0))
    b_spec = pl.BlockSpec((K, N), lambda i: (0, 0))
    y_spec = pl.BlockSpec((tm, N), lambda i: (i, 0))

    cost = pl.CostEstimate(
        flops=2 * Mp * K * N,
        transcendentals=Mp * N if act == "sigmoid" else 0,
        bytes_accessed=a.size * 2 + b.size * 2 + Mp * N * 4)

    if with_stats:
        y, stats = pl.pallas_call(
            functools.partial(_gemm_stats_kernel, m_real=M, tile_m=tm),
            out_shape=(jax.ShapeDtypeStruct((Mp, N), jnp.float32),
                       jax.ShapeDtypeStruct((2, N), jnp.float32)),
            grid=grid,
            in_specs=[a_spec, b_spec],
            out_specs=(y_spec, pl.BlockSpec((2, N), lambda i: (0, 0))),
            scratch_shapes=[pltpu.VMEM((2, N), jnp.float32)],
            compiler_params=pltpu.CompilerParams(
                dimension_semantics=("arbitrary",),   # stats accumulate over M
                vmem_limit_bytes=VMEM_LIMIT),
            cost_estimate=cost,
        )(a, b)
        return y, stats

    y = pl.pallas_call(
        functools.partial(_gemm_act_kernel, act=act),
        out_shape=jax.ShapeDtypeStruct((Mp, N), jnp.float32),
        grid=grid,
        in_specs=[a_spec, b_spec],
        out_specs=y_spec,
        compiler_params=pltpu.CompilerParams(
            dimension_semantics=("parallel",),        # megacore on v7x
            vmem_limit_bytes=VMEM_LIMIT),
        cost_estimate=cost,
    )(a, b)
    return y


def affine_leaky(x, scale, shift):
    """y = leaky_relu(x * scale[c] + shift[c]) on (Mp, C), tiled over M."""
    Mp, C = x.shape
    tm = min(TILE_M, Mp)
    if Mp % tm:
        tm = Mp
    grid = (Mp // tm,)
    return pl.pallas_call(
        _affine_leaky_kernel,
        out_shape=jax.ShapeDtypeStruct((Mp, C), jnp.float32),
        grid=grid,
        in_specs=[pl.BlockSpec((tm, C), lambda i: (i, 0)),
                  pl.BlockSpec((1, C), lambda i: (0, 0)),
                  pl.BlockSpec((1, C), lambda i: (0, 0))],
        out_specs=pl.BlockSpec((tm, C), lambda i: (i, 0)),
        compiler_params=pltpu.CompilerParams(
            dimension_semantics=("parallel",),
            vmem_limit_bytes=VMEM_LIMIT),
    )(x, scale.reshape(1, C), shift.reshape(1, C))


# ----------------------- JAX glue (im2col, layer wiring) -----------------------

def im2col(x_nhwc, k, s, p):
    N, H, W, C = x_nhwc.shape
    xp = jnp.pad(x_nhwc, ((0, 0), (p, p), (p, p), (0, 0)))
    Ho = (H + 2 * p - k) // s + 1
    Wo = (W + 2 * p - k) // s + 1
    cols = []
    for ky in range(k):
        for kx in range(k):
            cols.append(xp[:, ky:ky + s * Ho:s, kx:kx + s * Wo:s, :])
    patches = jnp.stack(cols, axis=3)              # (N, Ho, Wo, k*k, C)
    return patches.reshape(N * Ho * Wo, k * k * C), (N, Ho, Wo)


def _weight_mat(w_oihw):
    cout, cin, kh, kw = w_oihw.shape
    # (Cout, Cin, KH, KW) -> (KH, KW, Cin, Cout) -> (KH*KW*Cin, Cout)
    return jnp.transpose(w_oihw, (2, 3, 1, 0)).reshape(kh * kw * cin, cout)


def _conv_bn_leaky(x, w, gamma, beta, k, s, p):
    patches, (N, Ho, Wo) = im2col(x, k, s, p)
    M = N * Ho * Wo
    y, stats = conv_gemm(patches, _weight_mat(w), with_stats=True)
    mean = stats[0] / M
    var = stats[1] / M - mean * mean     # biased var (BN training mode)
    # NOTE: one-pass E[x^2]-E[x]^2; acceptable here since post-conv means are
    # small relative to the spread.
    scale = gamma * jax.lax.rsqrt(var + BN_EPS)
    shift = beta - mean * scale
    z = affine_leaky(y, scale, shift)
    return z[:M].reshape(N, Ho, Wo, -1)


def discriminator_forward(x_nchw, params):
    x = jnp.transpose(x_nchw, (0, 2, 3, 1))        # NCHW -> NHWC

    # Conv(nc -> ndf, 4, 2, 1) + LeakyReLU (fused GEMM epilogue)
    patches, (N, Ho, Wo) = im2col(x, 4, 2, 1)
    y = conv_gemm(patches, _weight_mat(params["w1"]), act="leaky")
    M = N * Ho * Wo
    x = y[:M].reshape(N, Ho, Wo, -1)

    # Conv(ndf -> 2ndf, 4, 2, 1) + BatchNorm(train) + LeakyReLU
    x = _conv_bn_leaky(x, params["w2"], params["g2"], params["b2"], 4, 2, 1)

    # Conv(2ndf -> 4ndf, 3, 2, 1) + BatchNorm(train) + LeakyReLU
    x = _conv_bn_leaky(x, params["w3"], params["g3"], params["b3"], 3, 2, 1)

    # Conv(4ndf -> 1, 4, 1, 0) + Sigmoid (fused GEMM epilogue)
    patches, (N, Ho, Wo) = im2col(x, 4, 1, 0)
    y = conv_gemm(patches, _weight_mat(params["w4"]), act="sigmoid")
    M = N * Ho * Wo
    return y[:M].reshape(-1)                       # == .view(-1, 1).squeeze(1)


# ----------------------- pure-JAX reference -----------------------

def reference_forward(x_nchw, params):
    def conv(x, w, s, p):
        return jax.lax.conv_general_dilated(
            x, w, window_strides=(s, s), padding=((p, p), (p, p)),
            dimension_numbers=("NCHW", "OIHW", "NCHW"))

    def bn(x, g, b):
        mean = jnp.mean(x, axis=(0, 2, 3), keepdims=True)
        var = jnp.var(x, axis=(0, 2, 3), keepdims=True)
        return ((x - mean) / jnp.sqrt(var + BN_EPS) * g.reshape(1, -1, 1, 1)
                + b.reshape(1, -1, 1, 1))

    leaky = lambda v: jnp.where(v > 0, v, LEAKY_SLOPE * v)
    h = leaky(conv(x_nchw, params["w1"], 2, 1))
    h = leaky(bn(conv(h, params["w2"], 2, 1), params["g2"], params["b2"]))
    h = leaky(bn(conv(h, params["w3"], 2, 1), params["g3"], params["b3"]))
    h = jax.nn.sigmoid(conv(h, params["w4"], 1, 0))
    return h.reshape(-1)


if __name__ == "__main__":
    nc, ndf = 3, 8
    N, H, W = 2, 32, 32            # 32x32 input so the last 4x4 conv yields 1x1

    key = jax.random.PRNGKey(0)
    k1, k2, k3, k4, kx = jax.random.split(key, 5)
    params = {
        "w1": 0.05 * jax.random.normal(k1, (ndf, nc, 4, 4), jnp.float32),
        "w2": 0.05 * jax.random.normal(k2, (ndf * 2, ndf, 4, 4), jnp.float32),
        "w3": 0.05 * jax.random.normal(k3, (ndf * 4, ndf * 2, 3, 3), jnp.float32),
        "w4": 0.05 * jax.random.normal(k4, (1, ndf * 4, 4, 4), jnp.float32),
        # BatchNorm2d default init: weight=1, bias=0
        "g2": jnp.ones((ndf * 2,), jnp.float32),
        "b2": jnp.zeros((ndf * 2,), jnp.float32),
        "g3": jnp.ones((ndf * 4,), jnp.float32),
        "b3": jnp.zeros((ndf * 4,), jnp.float32),
    }
    x = jax.random.normal(kx, (N, nc, H, W), jnp.float32)

    out = jax.block_until_ready(discriminator_forward(x, params))
    ref = reference_forward(x, params)

    assert out.shape == (N,), out.shape
    # bf16 GEMM operands (f32 accumulation) -> slightly looser tolerance.
    assert jnp.allclose(out, ref, rtol=2e-2, atol=2e-2), (out, ref)
    print("KERNEL_OK")
</pallas_src>

<mosaic_0001>
module attributes {stable_mosaic.version = 11 : i64} {
  func.func @_gemm_act_kernel(%arg0: i32, %arg1: memref<512x48xbf16, #tpu.memory_space<vmem>>, %arg2: memref<48x8xbf16, #tpu.memory_space<vmem>>, %arg3: memref<512x8xf32, #tpu.memory_space<vmem>>) attributes {dimension_semantics = [#tpu.dimension_semantics<parallel>], iteration_bounds = array<i64: 1>, scalar_prefetch = 0 : i64, scratch_operands = 0 : i64, tpu.core_type = #tpu.core_type<tc>, window_params = [{transform_indices = @transform_0, window_bounds = array<i64: 512, 48>}, {pipeline_mode = #tpu.pipeline_mode<synchronous>, transform_indices = @transform_1, window_bounds = array<i64: 48, 8>}, {transform_indices = @transform_2, window_bounds = array<i64: 512, 8>}]} {
    %c0 = arith.constant 0 : index
    %c0_0 = arith.constant 0 : index
    %0 = vector.load %arg1[%c0, %c0_0] : memref<512x48xbf16, #tpu.memory_space<vmem>>, vector<512x48xbf16>
    %c0_1 = arith.constant 0 : index
    %c0_2 = arith.constant 0 : index
    %1 = vector.load %arg2[%c0_1, %c0_2] : memref<48x8xbf16, #tpu.memory_space<vmem>>, vector<48x8xbf16>
    %cst = arith.constant dense<0.000000e+00> : vector<512x8xf32>
    %2 = tpu.matmul %0, %1, %cst {dimension_numbers = #tpu.dot_dimension_numbers<[1], [0], [0], [1], [0, 0, 1, 1], [], []>} : vector<512x48xbf16>, vector<48x8xbf16>, vector<512x8xf32> -> vector<512x8xf32>
    %cst_3 = arith.constant 0.000000e+00 : f32
    %3 = vector.broadcast %cst_3 : f32 to vector<512x8xf32>
    %4 = arith.cmpf ogt, %2, %3 : vector<512x8xf32>
    %cst_4 = arith.constant 2.000000e-01 : f32
    %5 = vector.broadcast %cst_4 : f32 to vector<512x8xf32>
    %6 = arith.mulf %5, %2 : vector<512x8xf32>
    %7 = arith.select %4, %2, %6 : vector<512x8xi1>, vector<512x8xf32>
    %c0_5 = arith.constant 0 : index
    %c0_6 = arith.constant 0 : index
    %8 = vector.load %arg3[%c0_5, %c0_6] : memref<512x8xf32, #tpu.memory_space<vmem>>, vector<512x8xf32>
    tpu.vector_store %arg3[%c0_5, %c0_6], %7 {strides = array<i32>} : memref<512x8xf32, #tpu.memory_space<vmem>>, vector<512x8xf32>,
    return
  }
  func.func @transform_0(%arg0: i32) -> (i32, i32) {
    %c0_i32 = arith.constant 0 : i32
    %c0_i32_0 = arith.constant 0 : i32
    return %arg0, %c0_i32 : i32, i32
  }
  func.func @transform_1(%arg0: i32) -> (i32, i32) {
    %c0_i32 = arith.constant 0 : i32
    %c0_i32_0 = arith.constant 0 : i32
    %c0_i32_1 = arith.constant 0 : i32
    return %c0_i32, %c0_i32_0 : i32, i32
  }
  func.func @transform_2(%arg0: i32) -> (i32, i32) {
    %c0_i32 = arith.constant 0 : i32
    %c0_i32_0 = arith.constant 0 : i32
    return %arg0, %c0_i32 : i32, i32
  }
}

</mosaic_0001>

<llo_original>
// kernel: tpu_custom_call.1
$region0: #{tpu_custom_call.1}
  #allocation0 [shape = 'u32[]', space=smem, size = 0x4, offset = 0x4, fixed_abs, tag = 'smem constant byte address 0x4 - core index']
  #allocation1 [shape = 'u32[72,128]{1,0:T(1,128)}', space=vmem, size = 0x9000, scoped, tag = 'internal scratch']
  %s0 = inlined_call_operand.vmem [shape: bf16[512,48], index: 0, kind: input, shape index: {}]
  %s1 = inlined_call_operand.vmem [shape: bf16[48,8], index: 1, kind: input, shape index: {}]
  %s2 = inlined_call_operand.vmem [shape: f32[512,8], index: 2, kind: output, shape index: {}]
  %s3 = sld [smem:[#allocation0]]
  $region18: #{tpu_custom_call.1} parent=0
    _
  %s5 = ssub.s32 1, %s3
  %s6 = scalar_select 0, %s5, %s3
  // Predicated region
  $region2: #{tpu_custom_call.1} parent=0 // pred_check
    _
  $region3: #{tpu_custom_call.1} parent=0 // pred_check_branch
    %8 = sbr.rel (0) target = $region5
  $region4: #{tpu_custom_call.1} parent=0 // pred_region
    _
  $region5: #{tpu_custom_call.1} parent=0 // pred_fallthru
    _
  // Predicated region
  $region6: #{tpu_custom_call.1} parent=0 // pred_check
    _
  $region7: #{tpu_custom_call.1} parent=0 // pred_check_branch
    %10 = sbr.rel (0) target = $region9
  $region8: #{tpu_custom_call.1} parent=0 // pred_region
    _
  $region9: #{tpu_custom_call.1} parent=0 // pred_fallthru
    _
  %v12 = vld [vmem:[%s0] sm:$0xf]
  %v13 = vld [vmem:[%s0 + $0x4] sm:$0xf]
  %v14 = vld [vmem:[%s0 + $0x8] sm:$0xf]
  %v15 = vld [vmem:[%s0 + $0xc] sm:$0xf]
  %v16 = vld [vmem:[%s0 + $0x10] sm:$0xf]
  %v17 = vld [vmem:[%s0 + $0x14] sm:$0xf]
  %v18 = vld [vmem:[%s0 + $0x18] sm:$0xf]
  %v19 = vld [vmem:[%s0 + $0x1c] sm:$0xf]
  %v20 = vld [vmem:[%s0 + $0x20] sm:$0xf]
  %v21 = vld [vmem:[%s0 + $0x24] sm:$0xf]
  %v22 = vld [vmem:[%s0 + $0x28] sm:$0xf]
  %v23 = vld [vmem:[%s0 + $0x2c] sm:$0xf]
  %v24 = vld [vmem:[%s0 + $0x30] sm:$0xf]
  %v25 = vld [vmem:[%s0 + $0x34] sm:$0xf]
  %v26 = vld [vmem:[%s0 + $0x38] sm:$0xf]
  %v27 = vld [vmem:[%s0 + $0x3c] sm:$0xf]
  %v28 = vld [vmem:[%s0 + $0x40] sm:$0xf]
  %v29 = vld [vmem:[%s0 + $0x44] sm:$0xf]
  %v30 = vld [vmem:[%s0 + $0x48] sm:$0xf]
  %v31 = vld [vmem:[%s0 + $0x4c] sm:$0xf]
  %v32 = vld [vmem:[%s0 + $0x50] sm:$0xf]
  %v33 = vld [vmem:[%s0 + $0x54] sm:$0xf]
  %v34 = vld [vmem:[%s0 + $0x58] sm:$0xf]
  %v35 = vld [vmem:[%s0 + $0x5c] sm:$0xf]
  %v36 = vld [vmem:[%s0 + $0x60] sm:$0xf]
  %v37 = vld [vmem:[%s0 + $0x64] sm:$0xf]
  %v38 = vld [vmem:[%s0 + $0x68] sm:$0xf]
  %v39 = vld [vmem:[%s0 + $0x6c] sm:$0xf]
  %v40 = vld [vmem:[%s0 + $0x70] sm:$0xf]
  %v41 = vld [vmem:[%s0 + $0x74] sm:$0xf]
  %v42 = vld [vmem:[%s0 + $0x78] sm:$0xf]
  %v43 = vld [vmem:[%s0 + $0x7c] sm:$0xf]
  %v44 = vld [vmem:[%s0 + $0x80] sm:$0xf]
  %v45 = vld [vmem:[%s0 + $0x84] sm:$0xf]
  %v46 = vld [vmem:[%s0 + $0x88] sm:$0xf]
  %v47 = vld [vmem:[%s0 + $0x8c] sm:$0xf]
  %v48 = vld [vmem:[%s0 + $0x90] sm:$0xf]
  %v49 = vld [vmem:[%s0 + $0x94] sm:$0xf]
  %v50 = vld [vmem:[%s0 + $0x98] sm:$0xf]
  %v51 = vld [vmem:[%s0 + $0x9c] sm:$0xf]
  %v52 = vld [vmem:[%s0 + $0xa0] sm:$0xf]
  %v53 = vld [vmem:[%s0 + $0xa4] sm:$0xf]
  %v54 = vld [vmem:[%s0 + $0xa8] sm:$0xf]
  %v55 = vld [vmem:[%s0 + $0xac] sm:$0xf]
  %v56 = vld [vmem:[%s0 + $0xb0] sm:$0xf]
  %v57 = vld [vmem:[%s0 + $0xb4] sm:$0xf]
  %v58 = vld [vmem:[%s0 + $0xb8] sm:$0xf]
  %v59 = vld [vmem:[%s0 + $0xbc] sm:$0xf]
  %v60 = vld [vmem:[%s0 + $0xc0] sm:$0xf]
  %v61 = vld [vmem:[%s0 + $0xc4] sm:$0xf]
  %v62 = vld [vmem:[%s0 + $0xc8] sm:$0xf]
  %v63 = vld [vmem:[%s0 + $0xcc] sm:$0xf]
  %v64 = vld [vmem:[%s0 + $0xd0] sm:$0xf]
  %v65 = vld [vmem:[%s0 + $0xd4] sm:$0xf]
  %v66 = vld [vmem:[%s0 + $0xd8] sm:$0xf]
  %v67 = vld [vmem:[%s0 + $0xdc] sm:$0xf]
  %v68 = vld [vmem:[%s0 + $0xe0] sm:$0xf]
  %v69 = vld [vmem:[%s0 + $0xe4] sm:$0xf]
  %v70 = vld [vmem:[%s0 + $0xe8] sm:$0xf]
  %v71 = vld [vmem:[%s0 + $0xec] sm:$0xf]
  %v72 = vld [vmem:[%s0 + $0xf0] sm:$0xf]
  %v73 = vld [vmem:[%s0 + $0xf4] sm:$0xf]
  %v74 = vld [vmem:[%s0 + $0xf8] sm:$0xf]
  %v75 = vld [vmem:[%s0 + $0xfc] sm:$0xf]
  %v76 = vld [vmem:[%s1] sm:$0xf]
  %v77 = vld [vmem:[%s1 + $0x4] sm:$0xf]
  %v78 = vld [vmem:[%s1 + $0x8] sm:$0xf]
  %v79 = vld [vmem:[%s1 + $0xc] sm:$0xf]
  %v80 = vld [vmem:[%s1 + $0x10] sm:$0xf]
  %v81 = vld [vmem:[%s1 + $0x14] sm:$0xf]
  %v146 = vunpack.c.l.b16 %v12
  %v147 = vunpack.c.l.b16 %v13
  %v148 = vunpack.c.l.b16 %v14
  %v149 = vunpack.c.l.b16 %v15
  %v150 = vunpack.c.l.b16 %v16
  %v151 = vunpack.c.l.b16 %v17
  %v152 = vunpack.c.l.b16 %v18
  %v153 = vunpack.c.l.b16 %v19
  %v154 = vunpack.c.l.b16 %v20
  %v155 = vunpack.c.l.b16 %v21
  %v156 = vunpack.c.l.b16 %v22
  %v157 = vunpack.c.l.b16 %v23
  %v158 = vunpack.c.l.b16 %v24
  %v159 = vunpack.c.l.b16 %v25
  %v160 = vunpack.c.l.b16 %v26
  %v161 = vunpack.c.l.b16 %v27
  %v162 = vunpack.c.l.b16 %v28
  %v163 = vunpack.c.l.b16 %v29
  %v164 = vunpack.c.l.b16 %v30
  %v165 = vunpack.c.l.b16 %v31
  %v166 = vunpack.c.l.b16 %v32
  %v167 = vunpack.c.l.b16 %v33
  %v168 = vunpack.c.l.b16 %v34
  %v169 = vunpack.c.l.b16 %v35
  %v170 = vunpack.c.l.b16 %v36
  %v171 = vunpack.c.l.b16 %v37
  %v172 = vunpack.c.l.b16 %v38
  %v173 = vunpack.c.l.b16 %v39
  %v174 = vunpack.c.l.b16 %v40
  %v175 = vunpack.c.l.b16 %v41
  %v176 = vunpack.c.l.b16 %v42
  %v177 = vunpack.c.l.b16 %v43
  %v178 = vunpack.c.l.b16 %v44
  %v179 = vunpack.c.l.b16 %v45
  %v180 = vunpack.c.l.b16 %v46
  %v181 = vunpack.c.l.b16 %v47
  %v182 = vunpack.c.l.b16 %v48
  %v183 = vunpack.c.l.b16 %v49
  %v184 = vunpack.c.l.b16 %v50
  %v185 = vunpack.c.l.b16 %v51
  %v186 = vunpack.c.l.b16 %v52
  %v187 = vunpack.c.l.b16 %v53
  %v188 = vunpack.c.l.b16 %v54
  %v189 = vunpack.c.l.b16 %v55
  %v190 = vunpack.c.l.b16 %v56
  %v191 = vunpack.c.l.b16 %v57
  %v192 = vunpack.c.l.b16 %v58
  %v193 = vunpack.c.l.b16 %v59
  %v194 = vunpack.c.l.b16 %v60
  %v195 = vunpack.c.l.b16 %v61
  %v196 = vunpack.c.l.b16 %v62
  %v197 = vunpack.c.l.b16 %v63
  %v198 = vunpack.c.l.b16 %v64
  %v199 = vunpack.c.l.b16 %v65
  %v200 = vunpack.c.l.b16 %v66
  %v201 = vunpack.c.l.b16 %v67
  %v202 = vunpack.c.l.b16 %v68
  %v203 = vunpack.c.l.b16 %v69
  %v204 = vunpack.c.l.b16 %v70
  %v205 = vunpack.c.l.b16 %v71
  %v206 = vunpack.c.l.b16 %v72
  %v207 = vunpack.c.l.b16 %v73
  %v208 = vunpack.c.l.b16 %v74
  %v209 = vunpack.c.l.b16 %v75
  %v210 = vpack.c.b16 %v147, %v146
  %v211 = vpack.c.b16 %v149, %v148
  %v212 = vpack.c.b16 %v151, %v150
  %v213 = vpack.c.b16 %v153, %v152
  %v214 = vpack.c.b16 %v155, %v154
  %v215 = vpack.c.b16 %v157, %v156
  %v216 = vpack.c.b16 %v159, %v158
  %v217 = vpack.c.b16 %v161, %v160
  %v218 = vpack.c.b16 %v163, %v162
  %v219 = vpack.c.b16 %v165, %v164
  %v220 = vpack.c.b16 %v167, %v166
  %v221 = vpack.c.b16 %v169, %v168
  %v222 = vpack.c.b16 %v171, %v170
  %v223 = vpack.c.b16 %v173, %v172
  %v224 = vpack.c.b16 %v175, %v174
  %v225 = vpack.c.b16 %v177, %v176
  %v226 = vpack.c.b16 %v179, %v178
  %v227 = vpack.c.b16 %v181, %v180
  %v228 = vpack.c.b16 %v183, %v182
  %v229 = vpack.c.b16 %v185, %v184
  %v230 = vpack.c.b16 %v187, %v186
  %v231 = vpack.c.b16 %v189, %v188
  %v232 = vpack.c.b16 %v191, %v190
  %v233 = vpack.c.b16 %v193, %v192
  %v234 = vpack.c.b16 %v195, %v194
  %v235 = vpack.c.b16 %v197, %v196
  %v236 = vpack.c.b16 %v199, %v198
  %v237 = vpack.c.b16 %v201, %v200
  %v238 = vpack.c.b16 %v203, %v202
  %v239 = vpack.c.b16 %v205, %v204
  %v240 = vpack.c.b16 %v207, %v206
  %v241 = vpack.c.b16 %v209, %v208
  %v248 = vunpack.c.l.b16 %v76
  %v249 = vunpack.c.l.b16 %v77
  %v250 = vunpack.c.l.b16 %v78
  %v251 = vunpack.c.l.b16 %v79
  %v252 = vunpack.c.l.b16 %v80
  %v253 = vunpack.c.l.b16 %v81
  %v254 = vpack.c.b16 %v249, %v248
  %v255 = vpack.c.b16 %v251, %v250
  %v256 = vpack.c.b16 %v253, %v252
  %vm260 = vcmask 392192
  %v262 = vsel %vm260, %v210, 0
  %v265 = vsel %vm260, %v211, 0
  %v268 = vsel %vm260, %v212, 0
  %v271 = vsel %vm260, %v213, 0
  %v274 = vsel %vm260, %v214, 0
  %v277 = vsel %vm260, %v215, 0
  %v280 = vsel %vm260, %v216, 0
  %v283 = vsel %vm260, %v217, 0
  %v286 = vsel %vm260, %v218, 0
  %v289 = vsel %vm260, %v219, 0
  %v292 = vsel %vm260, %v220, 0
  %v295 = vsel %vm260, %v221, 0
  %v298 = vsel %vm260, %v222, 0
  %v301 = vsel %vm260, %v223, 0
  %v304 = vsel %vm260, %v224, 0
  %v307 = vsel %vm260, %v225, 0
  %v310 = vsel %vm260, %v226, 0
  %v313 = vsel %vm260, %v227, 0
  %v316 = vsel %vm260, %v228, 0
  %v319 = vsel %vm260, %v229, 0
  %v322 = vsel %vm260, %v230, 0
  %v325 = vsel %vm260, %v231, 0
  %v328 = vsel %vm260, %v232, 0
  %v331 = vsel %vm260, %v233, 0
  %v334 = vsel %vm260, %v234, 0
  %v337 = vsel %vm260, %v235, 0
  %v340 = vsel %vm260, %v236, 0
  %v343 = vsel %vm260, %v237, 0
  %v346 = vsel %vm260, %v238, 0
  %v349 = vsel %vm260, %v239, 0
  %v352 = vsel %vm260, %v240, 0
  %v355 = vsel %vm260, %v241, 0
  %357 = vmatpush.bf16.msra.mxu0 0
  %358 = vmatpush.bf16.msra.mxu0 0
  %359 = vmatpush.bf16.msra.mxu0 0
  %360 = vmatpush.bf16.msra.mxu0 0
  %361 = vmatpush.bf16.msra.mxu0 0
  %362 = vmatpush.bf16.msra.mxu0 %v256
  %363 = vmatpush.bf16.msra.mxu0 %v255
  %364 = vmatpush.bf16.msra.mxu0 %v254
  %365 = vmatmul.bf16.gmra.mxu0 %v262
  %v366 = vpop.f32.mrf.mxu0
  %v367 = vadd.f32 0.0, %v366
  %v368 = vpop.f32.mrf.mxu0
  %v369 = vadd.f32 0.0, %v368
  %370 = vmatmul.bf16.gmra.mxu0 %v265
  %v371 = vpop.f32.mrf.mxu0
  %v372 = vadd.f32 0.0, %v371
  %v373 = vpop.f32.mrf.mxu0
  %v374 = vadd.f32 0.0, %v373
  %375 = vmatmul.bf16.gmra.mxu0 %v268
  %v376 = vpop.f32.mrf.mxu0
  %v377 = vadd.f32 0.0, %v376
  %v378 = vpop.f32.mrf.mxu0
  %v379 = vadd.f32 0.0, %v378
  %380 = vmatmul.bf16.gmra.mxu0 %v271
  %v381 = vpop.f32.mrf.mxu0
  %v382 = vadd.f32 0.0, %v381
  %v383 = vpop.f32.mrf.mxu0
  %v384 = vadd.f32 0.0, %v383
  %385 = vmatmul.bf16.gmra.mxu0 %v274
  %v386 = vpop.f32.mrf.mxu0
  %v387 = vadd.f32 0.0, %v386
  %v388 = vpop.f32.mrf.mxu0
  %v389 = vadd.f32 0.0, %v388
  %390 = vmatmul.bf16.gmra.mxu0 %v277
  %v391 = vpop.f32.mrf.mxu0
  %v392 = vadd.f32 0.0, %v391
  %v393 = vpop.f32.mrf.mxu0
  %v394 = vadd.f32 0.0, %v393
  %395 = vmatmul.bf16.gmra.mxu0 %v280
  %v396 = vpop.f32.mrf.mxu0
  %v397 = vadd.f32 0.0, %v396
  %v398 = vpop.f32.mrf.mxu0
  %v399 = vadd.f32 0.0, %v398
  %400 = vmatmul.bf16.gmra.mxu0 %v283
  %v401 = vpop.f32.mrf.mxu0
  %v402 = vadd.f32 0.0, %v401
  %v403 = vpop.f32.mrf.mxu0
  %v404 = vadd.f32 0.0, %v403
  %405 = vmatmul.bf16.gmra.mxu0 %v286
  %v406 = vpop.f32.mrf.mxu0
  %v407 = vadd.f32 0.0, %v406
  %v408 = vpop.f32.mrf.mxu0
  %v409 = vadd.f32 0.0, %v408
  %410 = vmatmul.bf16.gmra.mxu0 %v289
  %v411 = vpop.f32.mrf.mxu0
  %v412 = vadd.f32 0.0, %v411
  %v413 = vpop.f32.mrf.mxu0
  %v414 = vadd.f32 0.0, %v413
  %415 = vmatmul.bf16.gmra.mxu0 %v292
  %v416 = vpop.f32.mrf.mxu0
  %v417 = vadd.f32 0.0, %v416
  %v418 = vpop.f32.mrf.mxu0
  %v419 = vadd.f32 0.0, %v418
  %420 = vmatmul.bf16.gmra.mxu0 %v295
  %v421 = vpop.f32.mrf.mxu0
  %v422 = vadd.f32 0.0, %v421
  %v423 = vpop.f32.mrf.mxu0
  %v424 = vadd.f32 0.0, %v423
  %425 = vmatmul.bf16.gmra.mxu0 %v298
  %v426 = vpop.f32.mrf.mxu0
  %v427 = vadd.f32 0.0, %v426
  %v428 = vpop.f32.mrf.mxu0
  %v429 = vadd.f32 0.0, %v428
  %430 = vmatmul.bf16.gmra.mxu0 %v301
  %v431 = vpop.f32.mrf.mxu0
  %v432 = vadd.f32 0.0, %v431
  %v433 = vpop.f32.mrf.mxu0
  %v434 = vadd.f32 0.0, %v433
  %435 = vmatmul.bf16.gmra.mxu0 %v304
  %v436 = vpop.f32.mrf.mxu0
  %v437 = vadd.f32 0.0, %v436
  %v438 = vpop.f32.mrf.mxu0
  %v439 = vadd.f32 0.0, %v438
  %440 = vmatmul.bf16.gmra.mxu0 %v307
  %v441 = vpop.f32.mrf.mxu0
  %v442 = vadd.f32 0.0, %v441
  %v443 = vpop.f32.mrf.mxu0
  %v444 = vadd.f32 0.0, %v443
  %445 = vmatmul.bf16.gmra.mxu0 %v310
  %v446 = vpop.f32.mrf.mxu0
  %v447 = vadd.f32 0.0, %v446
  %v448 = vpop.f32.mrf.mxu0
  %v449 = vadd.f32 0.0, %v448
  %450 = vmatmul.bf16.gmra.mxu0 %v313
  %v451 = vpop.f32.mrf.mxu0
  %v452 = vadd.f32 0.0, %v451
  %v453 = vpop.f32.mrf.mxu0
  %v454 = vadd.f32 0.0, %v453
  %455 = vmatmul.bf16.gmra.mxu0 %v316
  %v456 = vpop.f32.mrf.mxu0
  %v457 = vadd.f32 0.0, %v456
  %v458 = vpop.f32.mrf.mxu0
  %v459 = vadd.f32 0.0, %v458
  %460 = vmatmul.bf16.gmra.mxu0 %v319
  %v461 = vpop.f32.mrf.mxu0
  %v462 = vadd.f32 0.0, %v461
  %v463 = vpop.f32.mrf.mxu0
  %v464 = vadd.f32 0.0, %v463
  %465 = vmatmul.bf16.gmra.mxu0 %v322
  %v466 = vpop.f32.mrf.mxu0
  %v467 = vadd.f32 0.0, %v466
  %v468 = vpop.f32.mrf.mxu0
  %v469 = vadd.f32 0.0, %v468
  %470 = vmatmul.bf16.gmra.mxu0 %v325
  %v471 = vpop.f32.mrf.mxu0
  %v472 = vadd.f32 0.0, %v471
  %v473 = vpop.f32.mrf.mxu0
  %v474 = vadd.f32 0.0, %v473
  %475 = vmatmul.bf16.gmra.mxu0 %v328
  %v476 = vpop.f32.mrf.mxu0
  %v477 = vadd.f32 0.0, %v476
  %v478 = vpop.f32.mrf.mxu0
  %v479 = vadd.f32 0.0, %v478
  %480 = vmatmul.bf16.gmra.mxu0 %v331
  %v481 = vpop.f32.mrf.mxu0
  %v482 = vadd.f32 0.0, %v481
  %v483 = vpop.f32.mrf.mxu0
  %v484 = vadd.f32 0.0, %v483
  %485 = vmatmul.bf16.gmra.mxu0 %v334
  %v486 = vpop.f32.mrf.mxu0
  %v487 = vadd.f32 0.0, %v486
  %v488 = vpop.f32.mrf.mxu0
  %v489 = vadd.f32 0.0, %v488
  %490 = vmatmul.bf16.gmra.mxu0 %v337
  %v491 = vpop.f32.mrf.mxu0
  %v492 = vadd.f32 0.0, %v491
  %v493 = vpop.f32.mrf.mxu0
  %v494 = vadd.f32 0.0, %v493
  %495 = vmatmul.bf16.gmra.mxu0 %v340
  %v496 = vpop.f32.mrf.mxu0
  %v497 = vadd.f32 0.0, %v496
  %v498 = vpop.f32.mrf.mxu0
  %v499 = vadd.f32 0.0, %v498
  %500 = vmatmul.bf16.gmra.mxu0 %v343
  %v501 = vpop.f32.mrf.mxu0
  %v502 = vadd.f32 0.0, %v501
  %v503 = vpop.f32.mrf.mxu0
  %v504 = vadd.f32 0.0, %v503
  %505 = vmatmul.bf16.gmra.mxu0 %v346
  %v506 = vpop.f32.mrf.mxu0
  %v507 = vadd.f32 0.0, %v506
  %v508 = vpop.f32.mrf.mxu0
  %v509 = vadd.f32 0.0, %v508
  %510 = vmatmul.bf16.gmra.mxu0 %v349
  %v511 = vpop.f32.mrf.mxu0
  %v512 = vadd.f32 0.0, %v511
  %v513 = vpop.f32.mrf.mxu0
  %v514 = vadd.f32 0.0, %v513
  %515 = vmatmul.bf16.gmra.mxu0 %v352
  %v516 = vpop.f32.mrf.mxu0
  %v517 = vadd.f32 0.0, %v516
  %v518 = vpop.f32.mrf.mxu0
  %v519 = vadd.f32 0.0, %v518
  %520 = vmatmul.bf16.gmra.mxu0 %v355
  %v521 = vpop.f32.mrf.mxu0
  %v522 = vadd.f32 0.0, %v521
  %v523 = vpop.f32.mrf.mxu0
  %v524 = vadd.f32 0.0, %v523
  %525 = vdwg.mxu0
  %vm526 = vcmp.gt.f32.partialorder %v367, 0.0
  %vm527 = vcmp.gt.f32.partialorder %v369, 0.0
  %vm528 = vcmp.gt.f32.partialorder %v372, 0.0
  %vm529 = vcmp.gt.f32.partialorder %v374, 0.0
  %vm530 = vcmp.gt.f32.partialorder %v377, 0.0
  %vm531 = vcmp.gt.f32.partialorder %v379, 0.0
  %vm532 = vcmp.gt.f32.partialorder %v382, 0.0
  %vm533 = vcmp.gt.f32.partialorder %v384, 0.0
  %vm534 = vcmp.gt.f32.partialorder %v387, 0.0
  %vm535 = vcmp.gt.f32.partialorder %v389, 0.0
  %vm536 = vcmp.gt.f32.partialorder %v392, 0.0
  %vm537 = vcmp.gt.f32.partialorder %v394, 0.0
  %vm538 = vcmp.gt.f32.partialorder %v397, 0.0
  %vm539 = vcmp.gt.f32.partialorder %v399, 0.0
  %vm540 = vcmp.gt.f32.partialorder %v402, 0.0
  %vm541 = vcmp.gt.f32.partialorder %v404, 0.0
  %vm542 = vcmp.gt.f32.partialorder %v407, 0.0
  %vm543 = vcmp.gt.f32.partialorder %v409, 0.0
  %vm544 = vcmp.gt.f32.partialorder %v412, 0.0
  %vm545 = vcmp.gt.f32.partialorder %v414, 0.0
  %vm546 = vcmp.gt.f32.partialorder %v417, 0.0
  %vm547 = vcmp.gt.f32.partialorder %v419, 0.0
  %vm548 = vcmp.gt.f32.partialorder %v422, 0.0
  %vm549 = vcmp.gt.f32.partialorder %v424, 0.0
  %vm550 = vcmp.gt.f32.partialorder %v427, 0.0
  %vm551 = vcmp.gt.f32.partialorder %v429, 0.0
  %vm552 = vcmp.gt.f32.partialorder %v432, 0.0
  %vm553 = vcmp.gt.f32.partialorder %v434, 0.0
  %vm554 = vcmp.gt.f32.partialorder %v437, 0.0
  %vm555 = vcmp.gt.f32.partialorder %v439, 0.0
  %vm556 = vcmp.gt.f32.partialorder %v442, 0.0
  %vm557 = vcmp.gt.f32.partialorder %v444, 0.0
  %vm558 = vcmp.gt.f32.partialorder %v447, 0.0
  %vm559 = vcmp.gt.f32.partialorder %v449, 0.0
  %vm560 = vcmp.gt.f32.partialorder %v452, 0.0
  %vm561 = vcmp.gt.f32.partialorder %v454, 0.0
  %vm562 = vcmp.gt.f32.partialorder %v457, 0.0
  %vm563 = vcmp.gt.f32.partialorder %v459, 0.0
  %vm564 = vcmp.gt.f32.partialorder %v462, 0.0
  %vm565 = vcmp.gt.f32.partialorder %v464, 0.0
  %vm566 = vcmp.gt.f32.partialorder %v467, 0.0
  %vm567 = vcmp.gt.f32.partialorder %v469, 0.0
  %vm568 = vcmp.gt.f32.partialorder %v472, 0.0
  %vm569 = vcmp.gt.f32.partialorder %v474, 0.0
  %vm570 = vcmp.gt.f32.partialorder %v477, 0.0
  %vm571 = vcmp.gt.f32.partialorder %v479, 0.0
  %vm572 = vcmp.gt.f32.partialorder %v482, 0.0
  %vm573 = vcmp.gt.f32.partialorder %v484, 0.0
  %vm574 = vcmp.gt.f32.partialorder %v487, 0.0
  %vm575 = vcmp.gt.f32.partialorder %v489, 0.0
  %vm576 = vcmp.gt.f32.partialorder %v492, 0.0
  %vm577 = vcmp.gt.f32.partialorder %v494, 0.0
  %vm578 = vcmp.gt.f32.partialorder %v497, 0.0
  %vm579 = vcmp.gt.f32.partialorder %v499, 0.0
  %vm580 = vcmp.gt.f32.partialorder %v502, 0.0
  %vm581 = vcmp.gt.f32.partialorder %v504, 0.0
  %vm582 = vcmp.gt.f32.partialorder %v507, 0.0
  %vm583 = vcmp.gt.f32.partialorder %v509, 0.0
  %vm584 = vcmp.gt.f32.partialorder %v512, 0.0
  %vm585 = vcmp.gt.f32.partialorder %v514, 0.0
  %vm586 = vcmp.gt.f32.partialorder %v517, 0.0
  %vm587 = vcmp.gt.f32.partialorder %v519, 0.0
  %vm588 = vcmp.gt.f32.partialorder %v522, 0.0
  %vm589 = vcmp.gt.f32.partialorder %v524, 0.0
  %v590 = vmul.f32 %v367, 0.2
  %v591 = vmul.f32 %v369, 0.2
  %v592 = vmul.f32 %v372, 0.2
  %v593 = vmul.f32 %v374, 0.2
  %v594 = vmul.f32 %v377, 0.2
  %v595 = vmul.f32 %v379, 0.2
  %v596 = vmul.f32 %v382, 0.2
  %v597 = vmul.f32 %v384, 0.2
  %v598 = vmul.f32 %v387, 0.2
  %v599 = vmul.f32 %v389, 0.2
  %v600 = vmul.f32 %v392, 0.2
  %v601 = vmul.f32 %v394, 0.2
  %v602 = vmul.f32 %v397, 0.2
  %v603 = vmul.f32 %v399, 0.2
  %v604 = vmul.f32 %v402, 0.2
  %v605 = vmul.f32 %v404, 0.2
  %v606 = vmul.f32 %v407, 0.2
  %v607 = vmul.f32 %v409, 0.2
  %v608 = vmul.f32 %v412, 0.2
  %v609 = vmul.f32 %v414, 0.2
  %v610 = vmul.f32 %v417, 0.2
  %v611 = vmul.f32 %v419, 0.2
  %v612 = vmul.f32 %v422, 0.2
  %v613 = vmul.f32 %v424, 0.2
  %v614 = vmul.f32 %v427, 0.2
  %v615 = vmul.f32 %v429, 0.2
  %v616 = vmul.f32 %v432, 0.2
  %v617 = vmul.f32 %v434, 0.2
  %v618 = vmul.f32 %v437, 0.2
  %v619 = vmul.f32 %v439, 0.2
  %v620 = vmul.f32 %v442, 0.2
  %v621 = vmul.f32 %v444, 0.2
  %v622 = vmul.f32 %v447, 0.2
  %v623 = vmul.f32 %v449, 0.2
  %v624 = vmul.f32 %v452, 0.2
  %v625 = vmul.f32 %v454, 0.2
  %v626 = vmul.f32 %v457, 0.2
  %v627 = vmul.f32 %v459, 0.2
  %v628 = vmul.f32 %v462, 0.2
  %v629 = vmul.f32 %v464, 0.2
  %v630 = vmul.f32 %v467, 0.2
  %v631 = vmul.f32 %v469, 0.2
  %v632 = vmul.f32 %v472, 0.2
  %v633 = vmul.f32 %v474, 0.2
  %v634 = vmul.f32 %v477, 0.2
  %v635 = vmul.f32 %v479, 0.2
  %v636 = vmul.f32 %v482, 0.2
  %v637 = vmul.f32 %v484, 0.2
  %v638 = vmul.f32 %v487, 0.2
  %v639 = vmul.f32 %v489, 0.2
  %v640 = vmul.f32 %v492, 0.2
  %v641 = vmul.f32 %v494, 0.2
  %v642 = vmul.f32 %v497, 0.2
  %v643 = vmul.f32 %v499, 0.2
  %v644 = vmul.f32 %v502, 0.2
  %v645 = vmul.f32 %v504, 0.2
  %v646 = vmul.f32 %v507, 0.2
  %v647 = vmul.f32 %v509, 0.2
  %v648 = vmul.f32 %v512, 0.2
  %v649 = vmul.f32 %v514, 0.2
  %v650 = vmul.f32 %v517, 0.2
  %v651 = vmul.f32 %v519, 0.2
  %v652 = vmul.f32 %v522, 0.2
  %v653 = vmul.f32 %v524, 0.2
  %v654 = vsel %vm526, %v367, %v590
  %v655 = vsel %vm527, %v369, %v591
  %v656 = vsel %vm528, %v372, %v592
  %v657 = vsel %vm529, %v374, %v593
  %v658 = vsel %vm530, %v377, %v594
  %v659 = vsel %vm531, %v379, %v595
  %v660 = vsel %vm532, %v382, %v596
  %v661 = vsel %vm533, %v384, %v597
  %v662 = vsel %vm534, %v387, %v598
  %v663 = vsel %vm535, %v389, %v599
  %v664 = vsel %vm536, %v392, %v600
  %v665 = vsel %vm537, %v394, %v601
  %v666 = vsel %vm538, %v397, %v602
  %v667 = vsel %vm539, %v399, %v603
  %v668 = vsel %vm540, %v402, %v604
  %v669 = vsel %vm541, %v404, %v605
  %v670 = vsel %vm542, %v407, %v606
  %v671 = vsel %vm543, %v409, %v607
  %v672 = vsel %vm544, %v412, %v608
  %v673 = vsel %vm545, %v414, %v609
  %v674 = vsel %vm546, %v417, %v610
  %v675 = vsel %vm547, %v419, %v611
  %v676 = vsel %vm548, %v422, %v612
  %v677 = vsel %vm549, %v424, %v613
  %v678 = vsel %vm550, %v427, %v614
  %v679 = vsel %vm551, %v429, %v615
  %v680 = vsel %vm552, %v432, %v616
  %v681 = vsel %vm553, %v434, %v617
  %v682 = vsel %vm554, %v437, %v618
  %v683 = vsel %vm555, %v439, %v619
  %v684 = vsel %vm556, %v442, %v620
  %v685 = vsel %vm557, %v444, %v621
  %v686 = vsel %vm558, %v447, %v622
  %v687 = vsel %vm559, %v449, %v623
  %v688 = vsel %vm560, %v452, %v624
  %v689 = vsel %vm561, %v454, %v625
  %v690 = vsel %vm562, %v457, %v626
  %v691 = vsel %vm563, %v459, %v627
  %v692 = vsel %vm564, %v462, %v628
  %v693 = vsel %vm565, %v464, %v629
  %v694 = vsel %vm566, %v467, %v630
  %v695 = vsel %vm567, %v469, %v631
  %v696 = vsel %vm568, %v472, %v632
  %v697 = vsel %vm569, %v474, %v633
  %v698 = vsel %vm570, %v477, %v634
  %v699 = vsel %vm571, %v479, %v635
  %v700 = vsel %vm572, %v482, %v636
  %v701 = vsel %vm573, %v484, %v637
  %v702 = vsel %vm574, %v487, %v638
  %v703 = vsel %vm575, %v489, %v639
  %v704 = vsel %vm576, %v492, %v640
  %v705 = vsel %vm577, %v494, %v641
  %v706 = vsel %vm578, %v497, %v642
  %v707 = vsel %vm579, %v499, %v643
  %v708 = vsel %vm580, %v502, %v644
  %v709 = vsel %vm581, %v504, %v645
  %v710 = vsel %vm582, %v507, %v646
  %v711 = vsel %vm583, %v509, %v647
  %v712 = vsel %vm584, %v512, %v648
  %v713 = vsel %vm585, %v514, %v649
  %v714 = vsel %vm586, %v517, %v650
  %v715 = vsel %vm587, %v519, %v651
  %v716 = vsel %vm588, %v522, %v652
  %v717 = vsel %vm589, %v524, %v653
  %vm718 = vcmask 64512
  %719 = vst.msk [vmem:[%s2] sm:$0xff] %vm718, %v654
  %720 = vst.msk [vmem:[%s2 + $0x8] sm:$0xff] %vm718, %v655
  %721 = vst.msk [vmem:[%s2 + $0x10] sm:$0xff] %vm718, %v656
  %722 = vst.msk [vmem:[%s2 + $0x18] sm:$0xff] %vm718, %v657
  %723 = vst.msk [vmem:[%s2 + $0x20] sm:$0xff] %vm718, %v658
  %724 = vst.msk [vmem:[%s2 + $0x28] sm:$0xff] %vm718, %v659
  %725 = vst.msk [vmem:[%s2 + $0x30] sm:$0xff] %vm718, %v660
  %726 = vst.msk [vmem:[%s2 + $0x38] sm:$0xff] %vm718, %v661
  %727 = vst.msk [vmem:[%s2 + $0x40] sm:$0xff] %vm718, %v662
  %728 = vst.msk [vmem:[%s2 + $0x48] sm:$0xff] %vm718, %v663
  %729 = vst.msk [vmem:[%s2 + $0x50] sm:$0xff] %vm718, %v664
  %730 = vst.msk [vmem:[%s2 + $0x58] sm:$0xff] %vm718, %v665
  %731 = vst.msk [vmem:[%s2 + $0x60] sm:$0xff] %vm718, %v666
  %732 = vst.msk [vmem:[%s2 + $0x68] sm:$0xff] %vm718, %v667
  %733 = vst.msk [vmem:[%s2 + $0x70] sm:$0xff] %vm718, %v668
  %734 = vst.msk [vmem:[%s2 + $0x78] sm:$0xff] %vm718, %v669
  %735 = vst.msk [vmem:[%s2 + $0x80] sm:$0xff] %vm718, %v670
  %736 = vst.msk [vmem:[%s2 + $0x88] sm:$0xff] %vm718, %v671
  %737 = vst.msk [vmem:[%s2 + $0x90] sm:$0xff] %vm718, %v672
  %738 = vst.msk [vmem:[%s2 + $0x98] sm:$0xff] %vm718, %v673
  %739 = vst.msk [vmem:[%s2 + $0xa0] sm:$0xff] %vm718, %v674
  %740 = vst.msk [vmem:[%s2 + $0xa8] sm:$0xff] %vm718, %v675
  %741 = vst.msk [vmem:[%s2 + $0xb0] sm:$0xff] %vm718, %v676
  %742 = vst.msk [vmem:[%s2 + $0xb8] sm:$0xff] %vm718, %v677
  %743 = vst.msk [vmem:[%s2 + $0xc0] sm:$0xff] %vm718, %v678
  %744 = vst.msk [vmem:[%s2 + $0xc8] sm:$0xff] %vm718, %v679
  %745 = vst.msk [vmem:[%s2 + $0xd0] sm:$0xff] %vm718, %v680
  %746 = vst.msk [vmem:[%s2 + $0xd8] sm:$0xff] %vm718, %v681
  %747 = vst.msk [vmem:[%s2 + $0xe0] sm:$0xff] %vm718, %v682
  %748 = vst.msk [vmem:[%s2 + $0xe8] sm:$0xff] %vm718, %v683
  %749 = vst.msk [vmem:[%s2 + $0xf0] sm:$0xff] %vm718, %v684
  %750 = vst.msk [vmem:[%s2 + $0xf8] sm:$0xff] %vm718, %v685
  %751 = vst.msk [vmem:[%s2 + $0x100] sm:$0xff] %vm718, %v686
  %752 = vst.msk [vmem:[%s2 + $0x108] sm:$0xff] %vm718, %v687
  %753 = vst.msk [vmem:[%s2 + $0x110] sm:$0xff] %vm718, %v688
  %754 = vst.msk [vmem:[%s2 + $0x118] sm:$0xff] %vm718, %v689
  %755 = vst.msk [vmem:[%s2 + $0x120] sm:$0xff] %vm718, %v690
  %756 = vst.msk [vmem:[%s2 + $0x128] sm:$0xff] %vm718, %v691
  %757 = vst.msk [vmem:[%s2 + $0x130] sm:$0xff] %vm718, %v692
  %758 = vst.msk [vmem:[%s2 + $0x138] sm:$0xff] %vm718, %v693
  %759 = vst.msk [vmem:[%s2 + $0x140] sm:$0xff] %vm718, %v694
  %760 = vst.msk [vmem:[%s2 + $0x148] sm:$0xff] %vm718, %v695
  %761 = vst.msk [vmem:[%s2 + $0x150] sm:$0xff] %vm718, %v696
  %762 = vst.msk [vmem:[%s2 + $0x158] sm:$0xff] %vm718, %v697
  %763 = vst.msk [vmem:[%s2 + $0x160] sm:$0xff] %vm718, %v698
  %764 = vst.msk [vmem:[%s2 + $0x168] sm:$0xff] %vm718, %v699
  %765 = vst.msk [vmem:[%s2 + $0x170] sm:$0xff] %vm718, %v700
  %766 = vst.msk [vmem:[%s2 + $0x178] sm:$0xff] %vm718, %v701
  %767 = vst.msk [vmem:[%s2 + $0x180] sm:$0xff] %vm718, %v702
  %768 = vst.msk [vmem:[%s2 + $0x188] sm:$0xff] %vm718, %v703
  %769 = vst.msk [vmem:[%s2 + $0x190] sm:$0xff] %vm718, %v704
  %770 = vst.msk [vmem:[%s2 + $0x198] sm:$0xff] %vm718, %v705
  %771 = vst.msk [vmem:[%s2 + $0x1a0] sm:$0xff] %vm718, %v706
  %772 = vst.msk [vmem:[%s2 + $0x1a8] sm:$0xff] %vm718, %v707
  %773 = vst.msk [vmem:[%s2 + $0x1b0] sm:$0xff] %vm718, %v708
  %774 = vst.msk [vmem:[%s2 + $0x1b8] sm:$0xff] %vm718, %v709
  %775 = vst.msk [vmem:[%s2 + $0x1c0] sm:$0xff] %vm718, %v710
  %776 = vst.msk [vmem:[%s2 + $0x1c8] sm:$0xff] %vm718, %v711
  %777 = vst.msk [vmem:[%s2 + $0x1d0] sm:$0xff] %vm718, %v712
  %778 = vst.msk [vmem:[%s2 + $0x1d8] sm:$0xff] %vm718, %v713
  %779 = vst.msk [vmem:[%s2 + $0x1e0] sm:$0xff] %vm718, %v714
  %780 = vst.msk [vmem:[%s2 + $0x1e8] sm:$0xff] %vm718, %v715
  %781 = vst.msk [vmem:[%s2 + $0x1f0] sm:$0xff] %vm718, %v716
  %782 = vst.msk [vmem:[%s2 + $0x1f8] sm:$0xff] %vm718, %v717
  // Predicated region
  $region10: #{tpu_custom_call.1} parent=0 // pred_check
    _
  $region11: #{tpu_custom_call.1} parent=0 // pred_check_branch
    %784 = sbr.rel (0) target = $region13
  $region12: #{tpu_custom_call.1} parent=0 // pred_region
    _
  $region13: #{tpu_custom_call.1} parent=0 // pred_fallthru
    _
  // Predicated region
  $region14: #{tpu_custom_call.1} parent=0 // pred_check
    _
  $region15: #{tpu_custom_call.1} parent=0 // pred_check_branch
    %786 = sbr.rel (0) target = $region17
  $region16: #{tpu_custom_call.1} parent=0 // pred_region
    _
  $region17: #{tpu_custom_call.1} parent=0 // pred_fallthru
    _

</llo_original>
